<compile_context>
chip_gen: v7x
topology: tpu7x:2x2x1
jax: 0.10.0
libtpu: 0.0.40
codegen_flags: <defaults>
</compile_context>

<pallas_src>
import numpy as np
import jax
import jax.numpy as jnp
from jax.experimental import pallas as pl
from jax.experimental.pallas import tpu as pltpu


def _round_up(a, b):
    return ((a + b - 1) // b) * b


# ----------------------------- Pallas kernel ------------------------------ #
def _make_fused_kernel(n_scales, n_batch):
    """y = relu(sum_s W_s @ x_s + b); bf16 in, f32 accumulate, bf16 out.

    Ref layout (positional): [w_0..w_{S-1}, bias, x_0..x_{S-1}, out]
      w_s : (C_out, C_in)   bf16  (BN scale pre-folded)
      bias: (C_out, 1)      f32   (folded BN bias)
      x_s : (N, C_in, TPX)  bf16  (pixels on the lane axis -> lane-dense)
      out : (N, C_out, TPX) bf16
    """
    def kernel(*refs):
        w_refs = refs[:n_scales]
        b_ref = refs[n_scales]
        x_refs = refs[n_scales + 1: 2 * n_scales + 1]
        o_ref = refs[2 * n_scales + 1]
        for n in range(n_batch):                      # tiny static batch, unrolled
            acc = jnp.dot(w_refs[0][...], x_refs[0][n],
                          preferred_element_type=jnp.float32)
            for s in range(1, n_scales):
                acc += jnp.dot(w_refs[s][...], x_refs[s][n],
                               preferred_element_type=jnp.float32)
            acc = acc + b_ref[...]                    # broadcast over lane axis
            o_ref[n] = jnp.maximum(acc, 0.0).astype(o_ref.dtype)
    return kernel


def fused_conv1x1_bn_relu(xs, ws, bias, *, max_tile_px=8192):
    """xs: list of (N, C_in, PX) bf16;  ws: list of (C_out, C_in) bf16;
    bias: (C_out, 1) f32.  Returns (N, C_out, PX) bf16.

    Pixel axis tiled in 128-multiples (lane-dense, unmasked stores).  The tile
    is split in two when possible so the single 'parallel' grid axis has >=2
    steps (keeps both v7x TensorCores busy); max_tile_px=8192 keeps the
    double-buffered bf16 blocks far under v7x's scoped VMEM even at large PX.
    """
    n_scales = len(xs)
    n, _, px = xs[0].shape
    c_out = ws[0].shape[0]

    px128 = _round_up(px, 128)
    tile_px = min(max_tile_px, px128)
    if tile_px == px128 and px128 >= 256:
        # split into >=2 lane-dense tiles so both v7x TensorCores get work
        tile_px = _round_up(px128 // 2, 128)
    px_pad = _round_up(px128, tile_px)
    if px_pad != px:
        xs = [jnp.pad(x, ((0, 0), (0, 0), (0, px_pad - px))) for x in xs]

    in_specs = (
        [pl.BlockSpec(w.shape, lambda p: (0, 0)) for w in ws]      # resident
        + [pl.BlockSpec(bias.shape, lambda p: (0, 0))]             # resident
        + [pl.BlockSpec((n, x.shape[1], tile_px), lambda p: (0, 0, p))
           for x in xs]
    )

    out = pl.pallas_call(
        _make_fused_kernel(n_scales, n),
        out_shape=jax.ShapeDtypeStruct((n, c_out, px_pad), jnp.bfloat16),
        grid_spec=pltpu.PrefetchScalarGridSpec(
            num_scalar_prefetch=0,
            grid=(px_pad // tile_px,),
            in_specs=in_specs,
            out_specs=pl.BlockSpec((n, c_out, tile_px), lambda p: (0, 0, p)),
        ),
        compiler_params=pltpu.CompilerParams(
            dimension_semantics=("parallel",)),
    )(*ws, bias, *xs)

    # pad region holds relu(bias); slice it off before any reshape
    return out[:, :, :px] if px_pad != px else out


# --------------------- exact separable resampling glue -------------------- #
def adaptive_avg_pool_matrix(in_size, out_size):
    """Row-stochastic matrix reproducing F.adaptive_avg_pool2d along one axis."""
    m = np.zeros((out_size, in_size), np.float32)
    for i in range(out_size):
        start = (i * in_size) // out_size
        end = -(-((i + 1) * in_size) // out_size)  # ceil
        m[i, start:end] = 1.0 / (end - start)
    return jnp.asarray(m)


def bilinear_matrix_align_corners(in_size, out_size):
    """Matrix reproducing F.interpolate(mode='bilinear', align_corners=True)."""
    m = np.zeros((out_size, in_size), np.float32)
    if out_size == 1:
        m[0, 0] = 1.0
        return jnp.asarray(m)
    scale = (in_size - 1) / (out_size - 1)
    for i in range(out_size):
        src = i * scale
        lo = int(np.floor(src))
        hi = min(lo + 1, in_size - 1)
        frac = src - lo
        m[i, lo] += 1.0 - frac
        m[i, hi] += frac
    return jnp.asarray(m)


def _resample_bf16(feat_bf16, Mh, Mw):
    # out[n,c,i,j] = sum_{h,w} Mh[i,h] * Mw[j,w] * feat[n,c,h,w]
    # f32 accumulation, bf16 materialized intermediate (halves glue HBM bytes).
    r = jnp.einsum('ih,jw,nchw->ncij', Mh, Mw, feat_bf16,
                   preferred_element_type=jnp.float32)
    return r.astype(jnp.bfloat16)


# ------------------------------- Aggregator -------------------------------- #
def init_aggregator_params(key, in_dim, n_bins):
    c_in = in_dim * n_bins
    bound = 1.0 / np.sqrt(c_in)  # Conv2d default kaiming_uniform(a=sqrt(5)) bound
    conv_w = jax.random.uniform(key, (in_dim, c_in), jnp.float32, -bound, bound)
    return {
        "conv_w": conv_w,                      # (C_out, C_total), 1x1 kernel
        "bn_gamma": jnp.ones((in_dim,), jnp.float32),
        "bn_beta": jnp.zeros((in_dim,), jnp.float32),
        "bn_mean": jnp.zeros((in_dim,), jnp.float32),
        "bn_var": jnp.ones((in_dim,), jnp.float32),
        "bn_eps": 1e-5,
    }


def aggregator_forward(feats, params, target_idx):
    # TODO(synk): BatchNorm is applied in inference mode (running statistics);
    # training-mode batch-statistic computation is not implemented.
    N, _, H, W = feats[target_idx].shape
    xs = []
    for i, f in enumerate(feats):
        f16 = f.astype(jnp.bfloat16)
        _, c_i, h, w = f.shape
        if i < target_idx:
            Mh = adaptive_avg_pool_matrix(h, H)
            Mw = adaptive_avg_pool_matrix(w, W)
            r = _resample_bf16(f16, Mh, Mw)
        elif i == target_idx:
            r = f16
        else:
            Mh = bilinear_matrix_align_corners(h, H)
            Mw = bilinear_matrix_align_corners(w, W)
            r = _resample_bf16(f16, Mh, Mw)
        xs.append(r.reshape(N, c_i, H * W))        # contiguous reshape, no copy

    # Fold BN (running stats): scale into the 1x1 weight; bias stays as the
    # only epilogue affine term (f32).  Split W by channel range per scale
    # (exact, no numerical change) so no concatenated intermediate is needed.
    scale = params["bn_gamma"] / jnp.sqrt(params["bn_var"] + params["bn_eps"])
    w_folded = (params["conv_w"] * scale[:, None]).astype(jnp.bfloat16)
    bias = (params["bn_beta"] - params["bn_mean"] * scale)[:, None]  # (C_out, 1)

    ws, off = [], 0
    for x in xs:
        c_i = x.shape[1]
        ws.append(w_folded[:, off:off + c_i])
        off += c_i

    y = fused_conv1x1_bn_relu(xs, ws, bias)        # (N, C_out, H*W) bf16
    c_out = params["conv_w"].shape[0]
    return y.reshape(N, c_out, H, W)               # contiguous, no transpose


# --------------------------------- main ------------------------------------ #
if __name__ == "__main__":
    in_dim = 32
    bins = (1, 2, 3)          # only len(bins) matters for the module
    target_idx = 1
    N = 2

    key = jax.random.PRNGKey(0)
    k0, k1, k2, kw = jax.random.split(key, 4)
    # Multi-scale pyramid: higher-res before target (avg-pooled),
    # lower-res after target (bilinearly upsampled).
    feats = [
        jax.random.normal(k0, (N, in_dim, 32, 32), jnp.float32),
        jax.random.normal(k1, (N, in_dim, 16, 16), jnp.float32),
        jax.random.normal(k2, (N, in_dim, 8, 8), jnp.float32),
    ]
    params = init_aggregator_params(kw, in_dim, len(bins))

    out = aggregator_forward(feats, params, target_idx)
    out = jax.block_until_ready(out)
    assert out.shape == (N, in_dim, 16, 16)

    # Pure-JAX f32 reference of the same forward pass (conv/BN/ReLU in plain jnp).
    Mh0 = adaptive_avg_pool_matrix(32, 16); Mw0 = adaptive_avg_pool_matrix(32, 16)
    Mh2 = bilinear_matrix_align_corners(8, 16); Mw2 = bilinear_matrix_align_corners(8, 16)
    def _resample_f32(feat, Mh, Mw):
        return jnp.einsum('ih,jw,nchw->ncij', Mh, Mw, feat)
    cat = jnp.concatenate(
        [_resample_f32(feats[0], Mh0, Mw0), feats[1], _resample_f32(feats[2], Mh2, Mw2)],
        axis=1)
    conv = jnp.einsum('oc,nchw->nohw', params["conv_w"], cat)
    scale = params["bn_gamma"] / jnp.sqrt(params["bn_var"] + params["bn_eps"])
    bias = params["bn_beta"] - params["bn_mean"] * scale
    ref = jnp.maximum(conv * scale[None, :, None, None] + bias[None, :, None, None], 0.0)

    # Tolerance covers bf16 activations/weights/intermediates and bf16 output
    # (f32 MXU accumulation + f32 epilogue keep the error at the ~1e-2 level).
    np.testing.assert_allclose(np.asarray(out.astype(jnp.float32)),
                               np.asarray(ref), rtol=3e-2, atol=3e-2)
    print("KERNEL_OK")
</pallas_src>

<mosaic_0001>
module attributes {stable_mosaic.version = 11 : i64} {
  func.func @kernel(%arg0: i32, %arg1: memref<32x32xbf16, #tpu.memory_space<vmem>>, %arg2: memref<32x32xbf16, #tpu.memory_space<vmem>>, %arg3: memref<32x32xbf16, #tpu.memory_space<vmem>>, %arg4: memref<32x1xf32, #tpu.memory_space<vmem>>, %arg5: memref<2x32x128xbf16, #tpu.memory_space<vmem>>, %arg6: memref<2x32x128xbf16, #tpu.memory_space<vmem>>, %arg7: memref<2x32x128xbf16, #tpu.memory_space<vmem>>, %arg8: memref<2x32x128xbf16, #tpu.memory_space<vmem>>) attributes {dimension_semantics = [#tpu.dimension_semantics<parallel>], iteration_bounds = array<i64: 2>, scalar_prefetch = 0 : i64, scratch_operands = 0 : i64, tpu.core_type = #tpu.core_type<tc>, window_params = [{pipeline_mode = #tpu.pipeline_mode<synchronous>, transform_indices = @transform_0, window_bounds = array<i64: 32, 32>}, {pipeline_mode = #tpu.pipeline_mode<synchronous>, transform_indices = @transform_1, window_bounds = array<i64: 32, 32>}, {pipeline_mode = #tpu.pipeline_mode<synchronous>, transform_indices = @transform_2, window_bounds = array<i64: 32, 32>}, {pipeline_mode = #tpu.pipeline_mode<synchronous>, transform_indices = @transform_3, window_bounds = array<i64: 32, 1>}, {transform_indices = @transform_4, window_bounds = array<i64: 2, 32, 128>}, {transform_indices = @transform_5, window_bounds = array<i64: 2, 32, 128>}, {transform_indices = @transform_6, window_bounds = array<i64: 2, 32, 128>}, {transform_indices = @transform_7, window_bounds = array<i64: 2, 32, 128>}]} {
    %c0 = arith.constant 0 : index
    %c0_0 = arith.constant 0 : index
    %0 = vector.load %arg1[%c0, %c0_0] : memref<32x32xbf16, #tpu.memory_space<vmem>>, vector<32x32xbf16>
    %c0_1 = arith.constant 0 : index
    %c0_2 = arith.constant 0 : index
    %c0_3 = arith.constant 0 : index
    %1 = vector.load %arg5[%c0_1, %c0_2, %c0_3] : memref<2x32x128xbf16, #tpu.memory_space<vmem>>, vector<1x32x128xbf16>
    %2 = vector.shape_cast %1 : vector<1x32x128xbf16> to vector<32x128xbf16>
    %cst = arith.constant dense<0.000000e+00> : vector<32x128xf32>
    %3 = tpu.matmul %0, %2, %cst {dimension_numbers = #tpu.dot_dimension_numbers<[1], [0], [0], [1], [0, 0, 1, 1], [], []>} : vector<32x32xbf16>, vector<32x128xbf16>, vector<32x128xf32> -> vector<32x128xf32>
    %c0_4 = arith.constant 0 : index
    %c0_5 = arith.constant 0 : index
    %4 = vector.load %arg2[%c0_4, %c0_5] : memref<32x32xbf16, #tpu.memory_space<vmem>>, vector<32x32xbf16>
    %c0_6 = arith.constant 0 : index
    %c0_7 = arith.constant 0 : index
    %c0_8 = arith.constant 0 : index
    %5 = vector.load %arg6[%c0_6, %c0_7, %c0_8] : memref<2x32x128xbf16, #tpu.memory_space<vmem>>, vector<1x32x128xbf16>
    %6 = vector.shape_cast %5 : vector<1x32x128xbf16> to vector<32x128xbf16>
    %cst_9 = arith.constant dense<0.000000e+00> : vector<32x128xf32>
    %7 = tpu.matmul %4, %6, %cst_9 {dimension_numbers = #tpu.dot_dimension_numbers<[1], [0], [0], [1], [0, 0, 1, 1], [], []>} : vector<32x32xbf16>, vector<32x128xbf16>, vector<32x128xf32> -> vector<32x128xf32>
    %8 = arith.addf %3, %7 : vector<32x128xf32>
    %c0_10 = arith.constant 0 : index
    %c0_11 = arith.constant 0 : index
    %9 = vector.load %arg3[%c0_10, %c0_11] : memref<32x32xbf16, #tpu.memory_space<vmem>>, vector<32x32xbf16>
    %c0_12 = arith.constant 0 : index
    %c0_13 = arith.constant 0 : index
    %c0_14 = arith.constant 0 : index
    %10 = vector.load %arg7[%c0_12, %c0_13, %c0_14] : memref<2x32x128xbf16, #tpu.memory_space<vmem>>, vector<1x32x128xbf16>
    %11 = vector.shape_cast %10 : vector<1x32x128xbf16> to vector<32x128xbf16>
    %cst_15 = arith.constant dense<0.000000e+00> : vector<32x128xf32>
    %12 = tpu.matmul %9, %11, %cst_15 {dimension_numbers = #tpu.dot_dimension_numbers<[1], [0], [0], [1], [0, 0, 1, 1], [], []>} : vector<32x32xbf16>, vector<32x128xbf16>, vector<32x128xf32> -> vector<32x128xf32>
    %13 = arith.addf %8, %12 : vector<32x128xf32>
    %c0_16 = arith.constant 0 : index
    %c0_17 = arith.constant 0 : index
    %14 = vector.load %arg4[%c0_16, %c0_17] : memref<32x1xf32, #tpu.memory_space<vmem>>, vector<32x1xf32>
    %15 = vector.broadcast %14 : vector<32x1xf32> to vector<32x128xf32>
    %16 = arith.addf %13, %15 : vector<32x128xf32>
    %cst_18 = arith.constant 0.000000e+00 : f32
    %17 = vector.broadcast %cst_18 : f32 to vector<32x128xf32>
    %18 = arith.maximumf %16, %17 : vector<32x128xf32>
    %19 = arith.truncf %18 : vector<32x128xf32> to vector<32x128xbf16>
    %c0_19 = arith.constant 0 : index
    %c0_20 = arith.constant 0 : index
    %c0_21 = arith.constant 0 : index
    %20 = vector.load %arg8[%c0_19, %c0_20, %c0_21] : memref<2x32x128xbf16, #tpu.memory_space<vmem>>, vector<1x32x128xbf16>
    %21 = vector.shape_cast %20 : vector<1x32x128xbf16> to vector<32x128xbf16>
    %22 = vector.shape_cast %19 : vector<32x128xbf16> to vector<1x32x128xbf16>
    tpu.vector_store %arg8[%c0_19, %c0_20, %c0_21], %22 {strides = array<i32>} : memref<2x32x128xbf16, #tpu.memory_space<vmem>>, vector<1x32x128xbf16>,
    %c0_22 = arith.constant 0 : index
    %c0_23 = arith.constant 0 : index
    %23 = vector.load %arg1[%c0_22, %c0_23] : memref<32x32xbf16, #tpu.memory_space<vmem>>, vector<32x32xbf16>
    %c1 = arith.constant 1 : index
    %c0_24 = arith.constant 0 : index
    %c0_25 = arith.constant 0 : index
    %24 = vector.load %arg5[%c1, %c0_24, %c0_25] : memref<2x32x128xbf16, #tpu.memory_space<vmem>>, vector<1x32x128xbf16>
    %25 = vector.shape_cast %24 : vector<1x32x128xbf16> to vector<32x128xbf16>
    %cst_26 = arith.constant dense<0.000000e+00> : vector<32x128xf32>
    %26 = tpu.matmul %23, %25, %cst_26 {dimension_numbers = #tpu.dot_dimension_numbers<[1], [0], [0], [1], [0, 0, 1, 1], [], []>} : vector<32x32xbf16>, vector<32x128xbf16>, vector<32x128xf32> -> vector<32x128xf32>
    %c0_27 = arith.constant 0 : index
    %c0_28 = arith.constant 0 : index
    %27 = vector.load %arg2[%c0_27, %c0_28] : memref<32x32xbf16, #tpu.memory_space<vmem>>, vector<32x32xbf16>
    %c1_29 = arith.constant 1 : index
    %c0_30 = arith.constant 0 : index
    %c0_31 = arith.constant 0 : index
    %28 = vector.load %arg6[%c1_29, %c0_30, %c0_31] : memref<2x32x128xbf16, #tpu.memory_space<vmem>>, vector<1x32x128xbf16>
    %29 = vector.shape_cast %28 : vector<1x32x128xbf16> to vector<32x128xbf16>
    %cst_32 = arith.constant dense<0.000000e+00> : vector<32x128xf32>
    %30 = tpu.matmul %27, %29, %cst_32 {dimension_numbers = #tpu.dot_dimension_numbers<[1], [0], [0], [1], [0, 0, 1, 1], [], []>} : vector<32x32xbf16>, vector<32x128xbf16>, vector<32x128xf32> -> vector<32x128xf32>
    %31 = arith.addf %26, %30 : vector<32x128xf32>
    %c0_33 = arith.constant 0 : index
    %c0_34 = arith.constant 0 : index
    %32 = vector.load %arg3[%c0_33, %c0_34] : memref<32x32xbf16, #tpu.memory_space<vmem>>, vector<32x32xbf16>
    %c1_35 = arith.constant 1 : index
    %c0_36 = arith.constant 0 : index
    %c0_37 = arith.constant 0 : index
    %33 = vector.load %arg7[%c1_35, %c0_36, %c0_37] : memref<2x32x128xbf16, #tpu.memory_space<vmem>>, vector<1x32x128xbf16>
    %34 = vector.shape_cast %33 : vector<1x32x128xbf16> to vector<32x128xbf16>
    %cst_38 = arith.constant dense<0.000000e+00> : vector<32x128xf32>
    %35 = tpu.matmul %32, %34, %cst_38 {dimension_numbers = #tpu.dot_dimension_numbers<[1], [0], [0], [1], [0, 0, 1, 1], [], []>} : vector<32x32xbf16>, vector<32x128xbf16>, vector<32x128xf32> -> vector<32x128xf32>
    %36 = arith.addf %31, %35 : vector<32x128xf32>
    %c0_39 = arith.constant 0 : index
    %c0_40 = arith.constant 0 : index
    %37 = vector.load %arg4[%c0_39, %c0_40] : memref<32x1xf32, #tpu.memory_space<vmem>>, vector<32x1xf32>
    %38 = vector.broadcast %37 : vector<32x1xf32> to vector<32x128xf32>
    %39 = arith.addf %36, %38 : vector<32x128xf32>
    %cst_41 = arith.constant 0.000000e+00 : f32
    %40 = vector.broadcast %cst_41 : f32 to vector<32x128xf32>
    %41 = arith.maximumf %39, %40 : vector<32x128xf32>
    %42 = arith.truncf %41 : vector<32x128xf32> to vector<32x128xbf16>
    %c1_42 = arith.constant 1 : index
    %c0_43 = arith.constant 0 : index
    %c0_44 = arith.constant 0 : index
    %43 = vector.load %arg8[%c1_42, %c0_43, %c0_44] : memref<2x32x128xbf16, #tpu.memory_space<vmem>>, vector<1x32x128xbf16>
    %44 = vector.shape_cast %43 : vector<1x32x128xbf16> to vector<32x128xbf16>
    %45 = vector.shape_cast %42 : vector<32x128xbf16> to vector<1x32x128xbf16>
    tpu.vector_store %arg8[%c1_42, %c0_43, %c0_44], %45 {strides = array<i32>} : memref<2x32x128xbf16, #tpu.memory_space<vmem>>, vector<1x32x128xbf16>,
    return
  }
  func.func @transform_0(%arg0: i32) -> (i32, i32) {
    %c0_i32 = arith.constant 0 : i32
    %c0_i32_0 = arith.constant 0 : i32
    %c0_i32_1 = arith.constant 0 : i32
    return %c0_i32, %c0_i32_0 : i32, i32
  }
  func.func @transform_1(%arg0: i32) -> (i32, i32) {
    %c0_i32 = arith.constant 0 : i32
    %c0_i32_0 = arith.constant 0 : i32
    %c0_i32_1 = arith.constant 0 : i32
    return %c0_i32, %c0_i32_0 : i32, i32
  }
  func.func @transform_2(%arg0: i32) -> (i32, i32) {
    %c0_i32 = arith.constant 0 : i32
    %c0_i32_0 = arith.constant 0 : i32
    %c0_i32_1 = arith.constant 0 : i32
    return %c0_i32, %c0_i32_0 : i32, i32
  }
  func.func @transform_3(%arg0: i32) -> (i32, i32) {
    %c0_i32 = arith.constant 0 : i32
    %c0_i32_0 = arith.constant 0 : i32
    %c0_i32_1 = arith.constant 0 : i32
    return %c0_i32, %c0_i32_0 : i32, i32
  }
  func.func @transform_4(%arg0: i32) -> (i32, i32, i32) {
    %c0_i32 = arith.constant 0 : i32
    %c0_i32_0 = arith.constant 0 : i32
    %c0_i32_1 = arith.constant 0 : i32
    return %c0_i32, %c0_i32_0, %arg0 : i32, i32, i32
  }
  func.func @transform_5(%arg0: i32) -> (i32, i32, i32) {
    %c0_i32 = arith.constant 0 : i32
    %c0_i32_0 = arith.constant 0 : i32
    %c0_i32_1 = arith.constant 0 : i32
    return %c0_i32, %c0_i32_0, %arg0 : i32, i32, i32
  }
  func.func @transform_6(%arg0: i32) -> (i32, i32, i32) {
    %c0_i32 = arith.constant 0 : i32
    %c0_i32_0 = arith.constant 0 : i32
    %c0_i32_1 = arith.constant 0 : i32
    return %c0_i32, %c0_i32_0, %arg0 : i32, i32, i32
  }
  func.func @transform_7(%arg0: i32) -> (i32, i32, i32) {
    %c0_i32 = arith.constant 0 : i32
    %c0_i32_0 = arith.constant 0 : i32
    %c0_i32_1 = arith.constant 0 : i32
    return %c0_i32, %c0_i32_0, %arg0 : i32, i32, i32
  }
}

</mosaic_0001>

<llo_original>
// kernel: tpu_custom_call.1
$region0: #{tpu_custom_call.1}
  #allocation0 [shape = 'u32[]', space=smem, size = 0x4, offset = 0x4, fixed_abs, tag = 'smem constant byte address 0x4 - core index']
  #allocation1 [shape = 'u32[144,128]{1,0:T(1,128)}', space=vmem, size = 0x12000, scoped, tag = 'internal scratch']
  %s0 = inlined_call_operand.vmem [shape: bf16[32,32], index: 0, kind: input, shape index: {}]
  %s1 = inlined_call_operand.vmem [shape: bf16[32,32], index: 1, kind: input, shape index: {}]
  %s2 = inlined_call_operand.hbm [shape: bf16[32,32], index: 2, kind: input, shape index: {}]
  %s3 = inlined_call_operand.vmem [shape: f32[32,1], index: 3, kind: input, shape index: {}]
  %s4 = inlined_call_operand.hbm [shape: bf16[2,32,256], index: 4, kind: input, shape index: {}]
  %s5 = inlined_call_operand.hbm [shape: bf16[2,32,256], index: 5, kind: input, shape index: {}]
  %s6 = inlined_call_operand.hbm [shape: bf16[2,32,256], index: 6, kind: input, shape index: {}]
  %s7 = inlined_call_operand.hbm [shape: bf16[2,32,256], index: 7, kind: output, shape index: {}]
  %s8 = sld [smem:[#allocation0]]
  $region77: #{tpu_custom_call.1} parent=0
    _
  %s10 = ssub.s32 1, %s8
  %s11 = scalar_select 0, %s10, %s8
  $region1: #{tpu_custom_call.1} parent=0
    #allocation2 [shape = 'u8[8192]{0}', space=vmem, size = 0x2000, scoped, tag = 'input window, operand 2, single buffered']
    #allocation3 [shape = 's32[2]{0}', space=sflag, size = 0x8, scoped, tag = 'scoped memory for tpu_custom_call.1']
    #allocation4 [shape = 's32[2]{0}', space=sflag, size = 0x8, scoped, tag = 'scoped memory for tpu_custom_call.1']
    #allocation5 [shape = 'u8[32768]{0}', space=vmem, size = 0x8000, scoped, tag = 'input window, operand 4']
    #allocation6 [shape = 's32[2]{0}', space=sflag, size = 0x8, scoped, tag = 'scoped memory for tpu_custom_call.1']
    #allocation7 [shape = 'u8[32768]{0}', space=vmem, size = 0x8000, scoped, tag = 'input window, operand 5']
    #allocation8 [shape = 'u8[32768]{0}', space=vmem, size = 0x8000, scoped, tag = 'input window, operand 6']
    #allocation9 [shape = 's32[2]{0}', space=sflag, size = 0x8, scoped, tag = 'scoped memory for tpu_custom_call.1']
    #allocation10 [shape = 'u8[32768]{0}', space=vmem, size = 0x8000, scoped, tag = 'output window, operand 0']
    %12 = vsyncpa [#allocation3], 0
    %13 = vsyncpa [#allocation6], 0
    %s14 = scalar_lea.sflag [#allocation6], 1
    %15 = vsyncpa %s14, 0
    %16 = vsyncpa [#allocation9], 0
    %s17 = scalar_lea.sflag [#allocation9], 1
    %18 = vsyncpa %s17, 0
    %19 = vsyncpa [#allocation4], 0
    %s20 = scalar_lea.sflag [#allocation4], 1
    %21 = vsyncpa %s20, 0
    loop: start=0, step=1, limit=4
    $region2: #{tpu_custom_call.1} parent=1 // loop_pre_header
      _
    $region3: #{tpu_custom_call.1} parent=1 // loop_header
      %s23 = sphi 0, %s27
      %p24 = scmp.ge.s32.totalorder %s23, 4
      %s31 = sphi 0, %s31
      %s33 = sphi 0, %s31
      %s34 = sphi 0, %s33
      %s48 = sphi 0, %s34
      %s52 = sphi 0, %s52
      %s54 = sphi 0, %s52
      %s55 = sphi 0, %s54
      %s69 = sphi 0, %s55
      %s73 = sphi 0, %s73
      %s75 = sphi 0, %s73
      %s76 = sphi 0, %s75
      %s90 = sphi 0, %s76
      %s94 = sphi 0, %s94
      %s96 = sphi 0, %s94
      %s97 = sphi 0, %s96
      %s111 = sphi 0, %s97
      %s117 = sphi 0, %s119
      %s120 = sphi 0, %s117
      %s121 = sphi 0, %s120
      %s137 = sphi 0, %s121
      %s143 = sphi 0, %s145
      %s146 = sphi 0, %s143
      %s147 = sphi 0, %s146
      %s163 = sphi 0, %s147
      %s169 = sphi 0, %s171
      %s172 = sphi 0, %s169
      %s173 = sphi 0, %s172
      %s189 = sphi 0, %s173
      %s195 = sphi 0, %s197
      %s198 = sphi 0, %s195
      %s199 = sphi 0, %s198
      %s215 = sphi 0, %s199
    $region4: #{tpu_custom_call.1} parent=1 // loop_header_branch
      %26 = sbr.rel (%p24) target = $region8
    $region5: #{tpu_custom_call.1} parent=1 // loop_body
      %s28 = ssub.s32 %s23, 1
      %s29 = ssub.s32 %s23, 2
      %s30 = sadd.s32 %s23, 1
      %s32 = sadd.s32 %s31, 1
      %p35 = scmp.eq.s32.totalorder %s23, 1
      %p36 = scmp.ne.s32.totalorder %s31, %s33
      %p37 = scmp.eq.s32.totalorder %s23, 0
      %p38 = por %p36, %p37
      %p39 = scmp.ne.s32.totalorder %s31, %s33
      %p40 = scmp.eq.s32.totalorder %s28, 1
      %p41 = por %p39, %p40
      %p42 = scmp.ne.s32.totalorder %s33, %s34
      %p43 = scmp.eq.s32.totalorder %s28, 0
      %p44 = por %p42, %p43
      %p45 = scmp.ne.s32.totalorder %s33, %s34
      %p46 = scmp.eq.s32.totalorder %s29, 1
      %p47 = por %p45, %p46
      %p49 = scmp.ne.s32.totalorder %s34, %s48
      %p50 = scmp.eq.s32.totalorder %s29, 0
      %p51 = por %p49, %p50
      %s53 = sadd.s32 %s52, 1
      %p56 = scmp.eq.s32.totalorder %s23, 1
      %p57 = scmp.ne.s32.totalorder %s52, %s54
      %p58 = scmp.eq.s32.totalorder %s23, 0
      %p59 = por %p57, %p58
      %p60 = scmp.ne.s32.totalorder %s52, %s54
      %p61 = scmp.eq.s32.totalorder %s28, 1
      %p62 = por %p60, %p61
      %p63 = scmp.ne.s32.totalorder %s54, %s55
      %p64 = scmp.eq.s32.totalorder %s28, 0
      %p65 = por %p63, %p64
      %p66 = scmp.ne.s32.totalorder %s54, %s55
      %p67 = scmp.eq.s32.totalorder %s29, 1
      %p68 = por %p66, %p67
      %p70 = scmp.ne.s32.totalorder %s55, %s69
      %p71 = scmp.eq.s32.totalorder %s29, 0
      %p72 = por %p70, %p71
      %s74 = sadd.s32 %s73, 1
      %p77 = scmp.eq.s32.totalorder %s23, 1
      %p78 = scmp.ne.s32.totalorder %s73, %s75
      %p79 = scmp.eq.s32.totalorder %s23, 0
      %p80 = por %p78, %p79
      %p81 = scmp.ne.s32.totalorder %s73, %s75
      %p82 = scmp.eq.s32.totalorder %s28, 1
      %p83 = por %p81, %p82
      %p84 = scmp.ne.s32.totalorder %s75, %s76
      %p85 = scmp.eq.s32.totalorder %s28, 0
      %p86 = por %p84, %p85
      %p87 = scmp.ne.s32.totalorder %s75, %s76
      %p88 = scmp.eq.s32.totalorder %s29, 1
      %p89 = por %p87, %p88
      %p91 = scmp.ne.s32.totalorder %s76, %s90
      %p92 = scmp.eq.s32.totalorder %s29, 0
      %p93 = por %p91, %p92
      %s95 = sadd.s32 %s94, 1
      %p98 = scmp.eq.s32.totalorder %s23, 1
      %p99 = scmp.ne.s32.totalorder %s94, %s96
      %p100 = scmp.eq.s32.totalorder %s23, 0
      %p101 = por %p99, %p100
      %p102 = scmp.ne.s32.totalorder %s94, %s96
      %p103 = scmp.eq.s32.totalorder %s28, 1
      %p104 = por %p102, %p103
      %p105 = scmp.ne.s32.totalorder %s96, %s97
      %p106 = scmp.eq.s32.totalorder %s28, 0
      %p107 = por %p105, %p106
      %p108 = scmp.ne.s32.totalorder %s96, %s97
      %p109 = scmp.eq.s32.totalorder %s29, 1
      %p110 = por %p108, %p109
      %p112 = scmp.ne.s32.totalorder %s97, %s111
      %p113 = scmp.eq.s32.totalorder %s29, 0
      %p114 = por %p112, %p113
      %s115 = ssub.s32 %s23, %s30
      %p116 = scmp.eq.s32.totalorder %s115, 0
      %s118 = sadd.s32 %s117, 1
      %s119 = scalar_select %p116, %s117, %s118
      %p122 = pneg %p116
      %p123 = scmp.eq.s32.totalorder %s23, 1
      %p124 = por %p122, %p123
      %p125 = scmp.ne.s32.totalorder %s117, %s120
      %p126 = scmp.eq.s32.totalorder %s23, 0
      %p127 = por %p125, %p126
      %p128 = scmp.ne.s32.totalorder %s117, %s120
      %p129 = scmp.eq.s32.totalorder %s28, 1
      %p130 = por %p128, %p129
      %p131 = scmp.ne.s32.totalorder %s120, %s121
      %p132 = scmp.eq.s32.totalorder %s28, 0
      %p133 = por %p131, %p132
      %p134 = scmp.ne.s32.totalorder %s120, %s121
      %p135 = scmp.eq.s32.totalorder %s29, 1
      %p136 = por %p134, %p135
      %p138 = scmp.ne.s32.totalorder %s121, %s137
      %p139 = scmp.eq.s32.totalorder %s29, 0
      %p140 = por %p138, %p139
      %s141 = ssub.s32 %s23, %s30
      %p142 = scmp.eq.s32.totalorder %s141, 0
      %s144 = sadd.s32 %s143, 1
      %s145 = scalar_select %p142, %s143, %s144
      %p148 = pneg %p142
      %p149 = scmp.eq.s32.totalorder %s23, 1
      %p150 = por %p148, %p149
      %p151 = scmp.ne.s32.totalorder %s143, %s146
      %p152 = scmp.eq.s32.totalorder %s23, 0
      %p153 = por %p151, %p152
      %p154 = scmp.ne.s32.totalorder %s143, %s146
      %p155 = scmp.eq.s32.totalorder %s28, 1
      %p156 = por %p154, %p155
      %p157 = scmp.ne.s32.totalorder %s146, %s147
      %p158 = scmp.eq.s32.totalorder %s28, 0
      %p159 = por %p157, %p158
      %p160 = scmp.ne.s32.totalorder %s146, %s147
      %p161 = scmp.eq.s32.totalorder %s29, 1
      %p162 = por %p160, %p161
      %p164 = scmp.ne.s32.totalorder %s147, %s163
      %p165 = scmp.eq.s32.totalorder %s29, 0
      %p166 = por %p164, %p165
      %s167 = ssub.s32 %s23, %s30
      %p168 = scmp.eq.s32.totalorder %s167, 0
      %s170 = sadd.s32 %s169, 1
      %s171 = scalar_select %p168, %s169, %s170
      %p174 = pneg %p168
      %p175 = scmp.eq.s32.totalorder %s23, 1
      %p176 = por %p174, %p175
      %p177 = scmp.ne.s32.totalorder %s169, %s172
      %p178 = scmp.eq.s32.totalorder %s23, 0
      %p179 = por %p177, %p178
      %p180 = scmp.ne.s32.totalorder %s169, %s172
      %p181 = scmp.eq.s32.totalorder %s28, 1
      %p182 = por %p180, %p181
      %p183 = scmp.ne.s32.totalorder %s172, %s173
      %p184 = scmp.eq.s32.totalorder %s28, 0
      %p185 = por %p183, %p184
      %p186 = scmp.ne.s32.totalorder %s172, %s173
      %p187 = scmp.eq.s32.totalorder %s29, 1
      %p188 = por %p186, %p187
      %p190 = scmp.ne.s32.totalorder %s173, %s189
      %p191 = scmp.eq.s32.totalorder %s29, 0
      %p192 = por %p190, %p191
      %s193 = ssub.s32 %s23, %s30
      %p194 = scmp.eq.s32.totalorder %s193, 0
      %s196 = sadd.s32 %s195, 1
      %s197 = scalar_select %p194, %s195, %s196
      %p200 = pneg %p194
      %p201 = scmp.eq.s32.totalorder %s23, 1
      %p202 = por %p200, %p201
      %p203 = scmp.ne.s32.totalorder %s195, %s198
      %p204 = scmp.eq.s32.totalorder %s23, 0
      %p205 = por %p203, %p204
      %p206 = scmp.ne.s32.totalorder %s195, %s198
      %p207 = scmp.eq.s32.totalorder %s28, 1
      %p208 = por %p206, %p207
      %p209 = scmp.ne.s32.totalorder %s198, %s199
      %p210 = scmp.eq.s32.totalorder %s28, 0
      %p211 = por %p209, %p210
      %p212 = scmp.ne.s32.totalorder %s198, %s199
      %p213 = scmp.eq.s32.totalorder %s29, 1
      %p214 = por %p212, %p213
      %p216 = scmp.ne.s32.totalorder %s199, %s215
      %p217 = scmp.eq.s32.totalorder %s29, 0
      %p218 = por %p216, %p217
      %p219 = scmp.le.s32.totalorder 1, %s23
      %p220 = scmp.lt.s32.totalorder %s23, 3
      %p221 = pnand %p219, %p220
      %p222 = pneg %p221
      // Predicated region
      $region9: #{tpu_custom_call.1} parent=5 // pred_check
        _
      $region10: #{tpu_custom_call.1} parent=5 // pred_check_branch
        %224 = sbr.rel (%p221) target = $region12
      $region11: #{tpu_custom_call.1} parent=5 // pred_region
        %s225 = ssub.s32 %s23, 1
        // Predicated region
        $region13: #{tpu_custom_call.1} parent=11 // pred_check
          %p226 = pneg %p44
        $region14: #{tpu_custom_call.1} parent=11 // pred_check_branch
          %228 = sbr.rel (%p226) target = $region16
        $region15: #{tpu_custom_call.1} parent=11 // pred_region
          _
        $region16: #{tpu_custom_call.1} parent=11 // pred_fallthru
          _
        // Predicated region
        $region17: #{tpu_custom_call.1} parent=11 // pred_check
          %p229 = pneg %p65
        $region18: #{tpu_custom_call.1} parent=11 // pred_check_branch
          %231 = sbr.rel (%p229) target = $region20
        $region19: #{tpu_custom_call.1} parent=11 // pred_region
          _
        $region20: #{tpu_custom_call.1} parent=11 // pred_fallthru
          _
        // Predicated region
        $region21: #{tpu_custom_call.1} parent=11 // pred_check
          %p232 = pneg %p86
        $region22: #{tpu_custom_call.1} parent=11 // pred_check_branch
          %234 = sbr.rel (%p232) target = $region24
        $region23: #{tpu_custom_call.1} parent=11 // pred_region
          %s236 = ssub.s32 256, 256
          %237 = vsyncadd [#allocation3], %s236
          %s238 = sshll.u32 [#allocation2], 4
          %s239 = int_to_ptr.vmem [resolvable:$true] %s238
          %244 = dma.hbm_to_vmem [thread:$0]  %s2, 256, %s239, [#allocation3], 64, 64, 4
        $region24: #{tpu_custom_call.1} parent=11 // pred_fallthru
          _
        // Predicated region
        $region25: #{tpu_custom_call.1} parent=11 // pred_check
          %p245 = pneg %p107
        $region26: #{tpu_custom_call.1} parent=11 // pred_check_branch
          %247 = sbr.rel (%p245) target = $region28
        $region27: #{tpu_custom_call.1} parent=11 // pred_region
          _
        $region28: #{tpu_custom_call.1} parent=11 // pred_fallthru
          _
      $region12: #{tpu_custom_call.1} parent=5 // pred_fallthru
        _
      %p248 = scmp.lt.s32.totalorder %s23, 2
      // Predicated region
      $region29: #{tpu_custom_call.1} parent=5 // pred_check
        %p249 = pneg %p248
      $region30: #{tpu_custom_call.1} parent=5 // pred_check_branch
        %251 = sbr.rel (%p249) target = $region32
      $region31: #{tpu_custom_call.1} parent=5 // pred_region
        // Predicated region
        $region33: #{tpu_custom_call.1} parent=31 // pred_check
          %p252 = pneg %p127
        $region34: #{tpu_custom_call.1} parent=31 // pred_check_branch
          %254 = sbr.rel (%p252) target = $region36
        $region35: #{tpu_custom_call.1} parent=31 // pred_region
          %s255 = sand.u32 %s23, 1
          %s256 = scalar_lea.sflag [#allocation6], %s255
          %s257 = sand.u32 %s117, 1
          %s258 = smul.addr %s257, 32
          %s259 = scalar_lea.vmem [#allocation5], %s258
          %s261 = ssub.s32 512, 512
          %262 = vsyncadd %s256, %s261
          %s263 = smul.addr %s23, 64
          %s264 = scalar_lea.hbm %s4, %s263
          %s265 = sshll.u32 %s259, 4
          %s266 = int_to_ptr.vmem [resolvable:$true] %s265
          %271 = dma.hbm_to_vmem [thread:$0]  %s264, 512, %s266, %s256, 128, 64, 4
        $region36: #{tpu_custom_call.1} parent=31 // pred_fallthru
          _
        // Predicated region
        $region37: #{tpu_custom_call.1} parent=31 // pred_check
          %p272 = pneg %p153
        $region38: #{tpu_custom_call.1} parent=31 // pred_check_branch
          %274 = sbr.rel (%p272) target = $region40
        $region39: #{tpu_custom_call.1} parent=31 // pred_region
          %s275 = sand.u32 %s23, 1
          %s276 = scalar_lea.sflag [#allocation6], %s275
          %s277 = sand.u32 %s143, 1
          %s278 = smul.addr %s277, 32
          %s279 = scalar_lea.vmem [#allocation7], %s278
          %s281 = ssub.s32 512, 512
          %282 = vsyncadd %s276, %s281
          %s283 = smul.addr %s23, 64
          %s284 = scalar_lea.hbm %s5, %s283
          %s285 = sshll.u32 %s279, 4
          %s286 = int_to_ptr.vmem [resolvable:$true] %s285
          %291 = dma.hbm_to_vmem [thread:$0]  %s284, 512, %s286, %s276, 128, 64, 4
        $region40: #{tpu_custom_call.1} parent=31 // pred_fallthru
          _
        // Predicated region
        $region41: #{tpu_custom_call.1} parent=31 // pred_check
          %p292 = pneg %p179
        $region42: #{tpu_custom_call.1} parent=31 // pred_check_branch
          %294 = sbr.rel (%p292) target = $region44
        $region43: #{tpu_custom_call.1} parent=31 // pred_region
          %s295 = sand.u32 %s169, 1
          %s296 = scalar_lea.sflag [#allocation9], %s295
          %s297 = sand.u32 %s169, 1
          %s298 = smul.addr %s297, 32
          %s299 = scalar_lea.vmem [#allocation8], %s298
          %s301 = ssub.s32 512, 512
          %302 = vsyncadd %s296, %s301
          %s303 = smul.addr %s23, 64
          %s304 = scalar_lea.hbm %s6, %s303
          %s305 = sshll.u32 %s299, 4
          %s306 = int_to_ptr.vmem [resolvable:$true] %s305
          %311 = dma.hbm_to_vmem [thread:$0]  %s304, 512, %s306, %s296, 128, 64, 4
        $region44: #{tpu_custom_call.1} parent=31 // pred_fallthru
          _
      $region32: #{tpu_custom_call.1} parent=5 // pred_fallthru
        _
      %p312 = scmp.le.s32.totalorder 1, %s23
      %p313 = scmp.lt.s32.totalorder %s23, 3
      %p314 = pnand %p312, %p313
      %p315 = pneg %p314
      // Predicated region
      $region45: #{tpu_custom_call.1} parent=5 // pred_check
        _
      $region46: #{tpu_custom_call.1} parent=5 // pred_check_branch
        %317 = sbr.rel (%p314) target = $region48
      $region47: #{tpu_custom_call.1} parent=5 // pred_region
        %s318 = ssub.s32 %s23, 1
        // Predicated region
        $region49: #{tpu_custom_call.1} parent=47 // pred_check
          %p319 = pneg %p86
        $region50: #{tpu_custom_call.1} parent=47 // pred_check_branch
          %321 = sbr.rel (%p319) target = $region52
        $region51: #{tpu_custom_call.1} parent=47 // pred_region
          %322 = dma.done [#allocation3], 256
        $region52: #{tpu_custom_call.1} parent=47 // pred_fallthru
          _
        %s323 = sand.u32 %s28, 1
        %s324 = scalar_lea.sflag [#allocation6], %s323
        %s325 = sand.u32 %s120, 1
        %s326 = smul.addr %s325, 32
        %s327 = scalar_lea.vmem [#allocation5], %s326
        // Predicated region
        $region53: #{tpu_custom_call.1} parent=47 // pred_check
          %p328 = pneg %p133
        $region54: #{tpu_custom_call.1} parent=47 // pred_check_branch
          %330 = sbr.rel (%p328) target = $region56
        $region55: #{tpu_custom_call.1} parent=47 // pred_region
          %331 = dma.done %s324, 512
        $region56: #{tpu_custom_call.1} parent=47 // pred_fallthru
          _
        %s332 = sand.u32 %s28, 1
        %s333 = scalar_lea.sflag [#allocation6], %s332
        %s334 = sand.u32 %s146, 1
        %s335 = smul.addr %s334, 32
        %s336 = scalar_lea.vmem [#allocation7], %s335
        // Predicated region
        $region57: #{tpu_custom_call.1} parent=47 // pred_check
          %p337 = pneg %p159
        $region58: #{tpu_custom_call.1} parent=47 // pred_check_branch
          %339 = sbr.rel (%p337) target = $region60
        $region59: #{tpu_custom_call.1} parent=47 // pred_region
          %340 = dma.done %s333, 512
        $region60: #{tpu_custom_call.1} parent=47 // pred_fallthru
          _
        %s341 = sand.u32 %s172, 1
        %s342 = scalar_lea.sflag [#allocation9], %s341
        %s343 = sand.u32 %s172, 1
        %s344 = smul.addr %s343, 32
        %s345 = scalar_lea.vmem [#allocation8], %s344
        // Predicated region
        $region61: #{tpu_custom_call.1} parent=47 // pred_check
          %p346 = pneg %p185
        $region62: #{tpu_custom_call.1} parent=47 // pred_check_branch
          %348 = sbr.rel (%p346) target = $region64
        $region63: #{tpu_custom_call.1} parent=47 // pred_region
          %349 = dma.done %s342, 512
        $region64: #{tpu_custom_call.1} parent=47 // pred_fallthru
          _
        %p350 = pneg %p44
        %p351 = pneg %p41
        %p352 = pneg %p65
        %p353 = pneg %p62
        %p354 = pneg %p86
        %p355 = pneg %p83
        %p356 = pneg %p107
        %p357 = pneg %p104
        %s358 = sand.u32 %s28, 1
        %s359 = scalar_lea.sflag [#allocation6], %s358
        %s360 = sand.u32 %s120, 1
        %s361 = smul.addr %s360, 32
        %s362 = scalar_lea.vmem [#allocation5], %s361
        %p363 = pneg %p133
        %p364 = pneg %p130
        %s365 = sand.u32 %s28, 1
        %s366 = scalar_lea.sflag [#allocation6], %s365
        %s367 = sand.u32 %s146, 1
        %s368 = smul.addr %s367, 32
        %s369 = scalar_lea.vmem [#allocation7], %s368
        %p370 = pneg %p159
        %p371 = pneg %p156
        %s372 = sand.u32 %s172, 1
        %s373 = scalar_lea.sflag [#allocation9], %s372
        %s374 = sand.u32 %s172, 1
        %s375 = smul.addr %s374, 32
        %s376 = scalar_lea.vmem [#allocation8], %s375
        %p377 = pneg %p185
        %p378 = pneg %p182
        %p379 = pneg %p211
        %p380 = pneg %p208
        %s381 = sand.u32 %s198, 1
        %s382 = scalar_lea.sflag [#allocation4], %s381
        %s383 = sand.u32 %s198, 1
        %s384 = smul.addr %s383, 32
        %s385 = scalar_lea.vmem [#allocation10], %s384
        %v387 = vld [vmem:[%s0] sm:$0xf]
        %v388 = vld [vmem:[%s0 + $0x4] sm:$0xf]
        %v389 = vld [vmem:[%s0 + $0x8] sm:$0xf]
        %v390 = vld [vmem:[%s0 + $0xc] sm:$0xf]
        %v391 = vld [vmem:[%s327] sm:$0xf]
        %v392 = vld [vmem:[%s327 + $0x4] sm:$0xf]
        %v393 = vld [vmem:[%s327 + $0x8] sm:$0xf]
        %v394 = vld [vmem:[%s327 + $0xc] sm:$0xf]
        %v395 = vld [vmem:[%s1] sm:$0xf]
        %v396 = vld [vmem:[%s1 + $0x4] sm:$0xf]
        %v397 = vld [vmem:[%s1 + $0x8] sm:$0xf]
        %v398 = vld [vmem:[%s1 + $0xc] sm:$0xf]
        %v399 = vld [vmem:[%s336] sm:$0xf]
        %v400 = vld [vmem:[%s336 + $0x4] sm:$0xf]
        %v401 = vld [vmem:[%s336 + $0x8] sm:$0xf]
        %v402 = vld [vmem:[%s336 + $0xc] sm:$0xf]
        %v407 = vunpack.c.l.b16 %v395
        %v408 = vunpack.c.l.b16 %v396
        %v409 = vunpack.c.l.b16 %v397
        %v410 = vunpack.c.l.b16 %v398
        %v411 = vpack.c.b16 %v408, %v407
        %v412 = vpack.c.b16 %v410, %v409
        %v417 = vunpack.c.l.b16 %v399
        %v418 = vunpack.c.l.b16 %v400
        %v419 = vunpack.c.l.b16 %v401
        %v420 = vunpack.c.l.b16 %v402
        %v421 = vpack.c.b16 %v418, %v417
        %v422 = vpack.c.b16 %v420, %v419
        %vm425 = vcmask 261120
        %v427 = vsel %vm425, %v411, 0
        %v430 = vsel %vm425, %v412, 0
        %432 = vmatprep.subr.bf16.mxu0 0
        %433 = vmatpush1.bf16.msra.mxu0 %v421
        %434 = vmatprep.subr.bf16.mxu0 0
        %435 = vmatpush1.bf16.msra.mxu0 %v422
        %436 = vmatprep.subr.bf16.mxu0 0
        %437 = vmatpush1.bf16.msra.mxu0 0
        %438 = vmatprep.subr.bf16.mxu0 0
        %439 = vmatpush1.bf16.msra.mxu0 0
        %440 = vmatprep.subr.bf16.mxu0 0
        %441 = vmatpush1.bf16.msra.mxu0 0
        %442 = vmatprep.subr.bf16.mxu0 0
        %443 = vmatpush1.bf16.msra.mxu0 0
        %444 = vmatprep.subr.bf16.mxu0 0
        %445 = vmatpush1.bf16.msra.mxu0 0
        %446 = vmatprep.subr.bf16.mxu0 0
        %447 = vmatpush1.bf16.msra.mxu0 0
        %448 = vmatprep.subr.bf16.mxu0 0
        %449 = vmatpush1.bf16.msra.mxu0 0
        %450 = vmatprep.subr.bf16.mxu0 0
        %451 = vmatpush1.bf16.msra.mxu0 0
        %452 = vmatprep.subr.bf16.mxu0 0
        %453 = vmatpush1.bf16.msra.mxu0 0
        %454 = vmatprep.subr.bf16.mxu0 0
        %455 = vmatpush1.bf16.msra.mxu0 0
        %456 = vmatprep.subr.bf16.mxu0 0
        %457 = vmatpush1.bf16.msra.mxu0 0
        %458 = vmatprep.subr.bf16.mxu0 0
        %459 = vmatpush1.bf16.msra.mxu0 0
        %460 = vmatprep.subr.bf16.mxu0 0
        %461 = vmatpush1.bf16.msra.mxu0 0
        %462 = vmatprep.subr.bf16.mxu0 0
        %463 = vmatpush1.bf16.msra.mxu0 0
        %464 = vmatprep.mubr.bf16.mxu0 0
        %465 = vmatmul.mubr.bf16.gmra.mrb[0].mxu0 %v427
        %v466 = vpop.f32.mrb[0].mxu0
        %v467 = vadd.f32 0.0, %v466
        %v468 = vpop.f32.mrb[0].mxu0
        %v469 = vpop.f32.mrb[0].mxu0
        %v470 = vadd.f32 0.0, %v469
        %v471 = vpop.f32.mrb[0].mxu0
        %472 = vmatprep.mubr.bf16.mxu0 0
        %473 = vmatmul.mubr.bf16.gmra.mrb[0].mxu0 %v430
        %v474 = vpop.f32.mrb[0].mxu0
        %v475 = vadd.f32 0.0, %v474
        %v476 = vpop.f32.mrb[0].mxu0
        %v477 = vpop.f32.mrb[0].mxu0
        %v478 = vadd.f32 0.0, %v477
        %v479 = vpop.f32.mrb[0].mxu0
        %480 = vdwg.mxu0
        %v485 = vunpack.c.l.b16 %v387
        %v486 = vunpack.c.l.b16 %v388
        %v487 = vunpack.c.l.b16 %v389
        %v488 = vunpack.c.l.b16 %v390
        %v489 = vpack.c.b16 %v486, %v485
        %v490 = vpack.c.b16 %v488, %v487
        %v495 = vunpack.c.l.b16 %v391
        %v496 = vunpack.c.l.b16 %v392
        %v497 = vunpack.c.l.b16 %v393
        %v498 = vunpack.c.l.b16 %v394
        %v499 = vpack.c.b16 %v496, %v495
        %v500 = vpack.c.b16 %v498, %v497
        %v504 = vsel %vm425, %v489, 0
        %v507 = vsel %vm425, %v490, 0
        %509 = vmatprep.subr.bf16.mxu0 0
        %510 = vmatpush1.bf16.msra.mxu0 %v499
        %511 = vmatprep.subr.bf16.mxu0 0
        %512 = vmatpush1.bf16.msra.mxu0 %v500
        %513 = vmatprep.subr.bf16.mxu0 0
        %514 = vmatpush1.bf16.msra.mxu0 0
        %515 = vmatprep.subr.bf16.mxu0 0
        %516 = vmatpush1.bf16.msra.mxu0 0
        %517 = vmatprep.subr.bf16.mxu0 0
        %518 = vmatpush1.bf16.msra.mxu0 0
        %519 = vmatprep.subr.bf16.mxu0 0
        %520 = vmatpush1.bf16.msra.mxu0 0
        %521 = vmatprep.subr.bf16.mxu0 0
        %522 = vmatpush1.bf16.msra.mxu0 0
        %523 = vmatprep.subr.bf16.mxu0 0
        %524 = vmatpush1.bf16.msra.mxu0 0
        %525 = vmatprep.subr.bf16.mxu0 0
        %526 = vmatpush1.bf16.msra.mxu0 0
        %527 = vmatprep.subr.bf16.mxu0 0
        %528 = vmatpush1.bf16.msra.mxu0 0
        %529 = vmatprep.subr.bf16.mxu0 0
        %530 = vmatpush1.bf16.msra.mxu0 0
        %531 = vmatprep.subr.bf16.mxu0 0
        %532 = vmatpush1.bf16.msra.mxu0 0
        %533 = vmatprep.subr.bf16.mxu0 0
        %534 = vmatpush1.bf16.msra.mxu0 0
        %535 = vmatprep.subr.bf16.mxu0 0
        %536 = vmatpush1.bf16.msra.mxu0 0
        %537 = vmatprep.subr.bf16.mxu0 0
        %538 = vmatpush1.bf16.msra.mxu0 0
        %539 = vmatprep.subr.bf16.mxu0 0
        %540 = vmatpush1.bf16.msra.mxu0 0
        %541 = vmatprep.mubr.bf16.mxu0 0
        %542 = vmatmul.mubr.bf16.gmra.mrb[0].mxu0 %v504
        %v543 = vpop.f32.mrb[0].mxu0
        %v544 = vadd.f32 %v467, %v543
        %v545 = vpop.f32.mrb[0].mxu0
        %v546 = vpop.f32.mrb[0].mxu0
        %v547 = vadd.f32 %v470, %v546
        %v548 = vpop.f32.mrb[0].mxu0
        %549 = vmatprep.mubr.bf16.mxu0 0
        %550 = vmatmul.mubr.bf16.gmra.mrb[0].mxu0 %v507
        %v551 = vpop.f32.mrb[0].mxu0
        %v552 = vadd.f32 %v475, %v551
        %v553 = vpop.f32.mrb[0].mxu0
        %v554 = vpop.f32.mrb[0].mxu0
        %v555 = vadd.f32 %v478, %v554
        %v556 = vpop.f32.mrb[0].mxu0
        %557 = vdwg.mxu0
        %v558 = vld [vmem:[#allocation2] sm:$0xf]
        %v559 = vld [vmem:[#allocation2 + $0x4] sm:$0xf]
        %v560 = vld [vmem:[#allocation2 + $0x8] sm:$0xf]
        %v561 = vld [vmem:[#allocation2 + $0xc] sm:$0xf]
        %v562 = vld [vmem:[%s345] sm:$0xf]
        %v563 = vld [vmem:[%s345 + $0x4] sm:$0xf]
        %v564 = vld [vmem:[%s345 + $0x8] sm:$0xf]
        %v565 = vld [vmem:[%s345 + $0xc] sm:$0xf]
        %v570 = vunpack.c.l.b16 %v558
        %v571 = vunpack.c.l.b16 %v559
        %v572 = vunpack.c.l.b16 %v560
        %v573 = vunpack.c.l.b16 %v561
        %v574 = vpack.c.b16 %v571, %v570
        %v575 = vpack.c.b16 %v573, %v572
        %v580 = vunpack.c.l.b16 %v562
        %v581 = vunpack.c.l.b16 %v563
        %v582 = vunpack.c.l.b16 %v564
        %v583 = vunpack.c.l.b16 %v565
        %v584 = vpack.c.b16 %v581, %v580
        %v585 = vpack.c.b16 %v583, %v582
        %v589 = vsel %vm425, %v574, 0
        %v592 = vsel %vm425, %v575, 0
        %594 = vmatprep.subr.bf16.mxu0 0
        %595 = vmatpush1.bf16.msra.mxu0 %v584
        %596 = vmatprep.subr.bf16.mxu0 0
        %597 = vmatpush1.bf16.msra.mxu0 %v585
        %598 = vmatprep.subr.bf16.mxu0 0
        %599 = vmatpush1.bf16.msra.mxu0 0
        %600 = vmatprep.subr.bf16.mxu0 0
        %601 = vmatpush1.bf16.msra.mxu0 0
        %602 = vmatprep.subr.bf16.mxu0 0
        %603 = vmatpush1.bf16.msra.mxu0 0
        %604 = vmatprep.subr.bf16.mxu0 0
        %605 = vmatpush1.bf16.msra.mxu0 0
        %606 = vmatprep.subr.bf16.mxu0 0
        %607 = vmatpush1.bf16.msra.mxu0 0
        %608 = vmatprep.subr.bf16.mxu0 0
        %609 = vmatpush1.bf16.msra.mxu0 0
        %610 = vmatprep.subr.bf16.mxu0 0
        %611 = vmatpush1.bf16.msra.mxu0 0
        %612 = vmatprep.subr.bf16.mxu0 0
        %613 = vmatpush1.bf16.msra.mxu0 0
        %614 = vmatprep.subr.bf16.mxu0 0
        %615 = vmatpush1.bf16.msra.mxu0 0
        %616 = vmatprep.subr.bf16.mxu0 0
        %617 = vmatpush1.bf16.msra.mxu0 0
        %618 = vmatprep.subr.bf16.mxu0 0
        %619 = vmatpush1.bf16.msra.mxu0 0
        %620 = vmatprep.subr.bf16.mxu0 0
        %621 = vmatpush1.bf16.msra.mxu0 0
        %622 = vmatprep.subr.bf16.mxu0 0
        %623 = vmatpush1.bf16.msra.mxu0 0
        %624 = vmatprep.subr.bf16.mxu0 0
        %625 = vmatpush1.bf16.msra.mxu0 0
        %626 = vmatprep.mubr.bf16.mxu0 0
        %627 = vmatmul.mubr.bf16.gmra.mrb[0].mxu0 %v589
        %v628 = vpop.f32.mrb[0].mxu0
        %v629 = vadd.f32 0.0, %v628
        %v630 = vpop.f32.mrb[0].mxu0
        %v631 = vpop.f32.mrb[0].mxu0
        %v632 = vadd.f32 0.0, %v631
        %v633 = vpop.f32.mrb[0].mxu0
        %634 = vmatprep.mubr.bf16.mxu0 0
        %635 = vmatmul.mubr.bf16.gmra.mrb[0].mxu0 %v592
        %v636 = vpop.f32.mrb[0].mxu0
        %v637 = vadd.f32 0.0, %v636
        %v638 = vpop.f32.mrb[0].mxu0
        %v639 = vpop.f32.mrb[0].mxu0
        %v640 = vadd.f32 0.0, %v639
        %v641 = vpop.f32.mrb[0].mxu0
        %642 = vdwg.mxu0
        %v643 = vadd.f32 %v544, %v629
        %v644 = vadd.f32 %v547, %v632
        %v645 = vadd.f32 %v552, %v637
        %v646 = vadd.f32 %v555, %v640
        %v647 = vld [vmem:[%s3] sm:$0xff]
        %v648 = vld [vmem:[%s3 + $0x8] sm:$0xff]
        %v649 = vld [vmem:[%s3 + $0x10] sm:$0xff]
        %v650 = vld [vmem:[%s3 + $0x18] sm:$0xff]
        %652 = vset.pattern.permute.xlu0 0
        %653 = vperm.xlu0 %652, %v647
        %v654 = vpop.permute.xlu0 %653
        %657 = vset.pattern.permute.xlu0 0
        %658 = vperm.xlu0 %657, %v648
        %v659 = vpop.permute.xlu0 %658
        %662 = vset.pattern.permute.xlu0 0
        %663 = vperm.xlu0 %662, %v649
        %v664 = vpop.permute.xlu0 %663
        %667 = vset.pattern.permute.xlu0 0
        %668 = vperm.xlu0 %667, %v650
        %v669 = vpop.permute.xlu0 %668
        %v671 = vadd.f32 %v643, %v654
        %v672 = vadd.f32 %v644, %v659
        %v673 = vadd.f32 %v645, %v664
        %v674 = vadd.f32 %v646, %v669
        %v675 = vmax.f32 %v671, 0.0
        %v676 = vmax.f32 %v672, 0.0
        %v677 = vmax.f32 %v673, 0.0
        %v678 = vmax.f32 %v674, 0.0
        %v679 = vpack.c.bf16 %v676, %v675
        %v680 = vpack.c.bf16 %v678, %v677
        %v683 = vunpack.c.l.b16 %v679
        %v684 = vunpack.c.h.b16 %v679
        %v685 = vunpack.c.l.b16 %v680
        %v686 = vunpack.c.h.b16 %v680
        %v687 = vpack.c.b16 %v683, %v683
        %v688 = vpack.c.b16 %v684, %v684
        %v689 = vpack.c.b16 %v685, %v685
        %v690 = vpack.c.b16 %v686, %v686
        %695 = vst [vmem:[%s385] sm:$0xf] %v687
        %696 = vst [vmem:[%s385 + $0x4] sm:$0xf] %v688
        %697 = vst [vmem:[%s385 + $0x8] sm:$0xf] %v689
        %698 = vst [vmem:[%s385 + $0xc] sm:$0xf] %v690
        %v699 = vld [vmem:[%s0] sm:$0xf]
        %v700 = vld [vmem:[%s0 + $0x4] sm:$0xf]
        %v701 = vld [vmem:[%s0 + $0x8] sm:$0xf]
        %v702 = vld [vmem:[%s0 + $0xc] sm:$0xf]
        %s703 = scalar_lea.vmem %s327, 16 [#allocation5]
        %v704 = vld [vmem:[%s703] sm:$0xf]
        %v705 = vld [vmem:[%s703 + $0x4] sm:$0xf]
        %v706 = vld [vmem:[%s703 + $0x8] sm:$0xf]
        %v707 = vld [vmem:[%s703 + $0xc] sm:$0xf]
        %v708 = vld [vmem:[%s1] sm:$0xf]
        %v709 = vld [vmem:[%s1 + $0x4] sm:$0xf]
        %v710 = vld [vmem:[%s1 + $0x8] sm:$0xf]
        %v711 = vld [vmem:[%s1 + $0xc] sm:$0xf]
        %s712 = scalar_lea.vmem %s336, 16 [#allocation7]
        %v713 = vld [vmem:[%s712] sm:$0xf]
        %v714 = vld [vmem:[%s712 + $0x4] sm:$0xf]
        %v715 = vld [vmem:[%s712 + $0x8] sm:$0xf]
        %v716 = vld [vmem:[%s712 + $0xc] sm:$0xf]
        %v721 = vunpack.c.l.b16 %v708
        %v722 = vunpack.c.l.b16 %v709
        %v723 = vunpack.c.l.b16 %v710
        %v724 = vunpack.c.l.b16 %v711
        %v725 = vpack.c.b16 %v722, %v721
        %v726 = vpack.c.b16 %v724, %v723
        %v731 = vunpack.c.l.b16 %v713
        %v732 = vunpack.c.l.b16 %v714
        %v733 = vunpack.c.l.b16 %v715
        %v734 = vunpack.c.l.b16 %v716
        %v735 = vpack.c.b16 %v732, %v731
        %v736 = vpack.c.b16 %v734, %v733
        %v740 = vsel %vm425, %v725, 0
        %v743 = vsel %vm425, %v726, 0
        %745 = vmatprep.subr.bf16.mxu0 0
        %746 = vmatpush1.bf16.msra.mxu0 %v735
        %747 = vmatprep.subr.bf16.mxu0 0
        %748 = vmatpush1.bf16.msra.mxu0 %v736
        %749 = vmatprep.subr.bf16.mxu0 0
        %750 = vmatpush1.bf16.msra.mxu0 0
        %751 = vmatprep.subr.bf16.mxu0 0
        %752 = vmatpush1.bf16.msra.mxu0 0
        %753 = vmatprep.subr.bf16.mxu0 0
        %754 = vmatpush1.bf16.msra.mxu0 0
        %755 = vmatprep.subr.bf16.mxu0 0
        %756 = vmatpush1.bf16.msra.mxu0 0
        %757 = vmatprep.subr.bf16.mxu0 0
        %758 = vmatpush1.bf16.msra.mxu0 0
        %759 = vmatprep.subr.bf16.mxu0 0
        %760 = vmatpush1.bf16.msra.mxu0 0
        %761 = vmatprep.subr.bf16.mxu0 0
        %762 = vmatpush1.bf16.msra.mxu0 0
        %763 = vmatprep.subr.bf16.mxu0 0
        %764 = vmatpush1.bf16.msra.mxu0 0
        %765 = vmatprep.subr.bf16.mxu0 0
        %766 = vmatpush1.bf16.msra.mxu0 0
        %767 = vmatprep.subr.bf16.mxu0 0
        %768 = vmatpush1.bf16.msra.mxu0 0
        %769 = vmatprep.subr.bf16.mxu0 0
        %770 = vmatpush1.bf16.msra.mxu0 0
        %771 = vmatprep.subr.bf16.mxu0 0
        %772 = vmatpush1.bf16.msra.mxu0 0
        %773 = vmatprep.subr.bf16.mxu0 0
        %774 = vmatpush1.bf16.msra.mxu0 0
        %775 = vmatprep.subr.bf16.mxu0 0
        %776 = vmatpush1.bf16.msra.mxu0 0
        %777 = vmatprep.mubr.bf16.mxu0 0
        %778 = vmatmul.mubr.bf16.gmra.mrb[0].mxu0 %v740
        %v779 = vpop.f32.mrb[0].mxu0
        %v780 = vadd.f32 0.0, %v779
        %v781 = vpop.f32.mrb[0].mxu0
        %v782 = vpop.f32.mrb[0].mxu0
        %v783 = vadd.f32 0.0, %v782
        %v784 = vpop.f32.mrb[0].mxu0
        %785 = vmatprep.mubr.bf16.mxu0 0
        %786 = vmatmul.mubr.bf16.gmra.mrb[0].mxu0 %v743
        %v787 = vpop.f32.mrb[0].mxu0
        %v788 = vadd.f32 0.0, %v787
        %v789 = vpop.f32.mrb[0].mxu0
        %v790 = vpop.f32.mrb[0].mxu0
        %v791 = vadd.f32 0.0, %v790
        %v792 = vpop.f32.mrb[0].mxu0
        %793 = vdwg.mxu0
        %v798 = vunpack.c.l.b16 %v699
        %v799 = vunpack.c.l.b16 %v700
        %v800 = vunpack.c.l.b16 %v701
        %v801 = vunpack.c.l.b16 %v702
        %v802 = vpack.c.b16 %v799, %v798
        %v803 = vpack.c.b16 %v801, %v800
        %v808 = vunpack.c.l.b16 %v704
        %v809 = vunpack.c.l.b16 %v705
        %v810 = vunpack.c.l.b16 %v706
        %v811 = vunpack.c.l.b16 %v707
        %v812 = vpack.c.b16 %v809, %v808
        %v813 = vpack.c.b16 %v811, %v810
        %v817 = vsel %vm425, %v802, 0
        %v820 = vsel %vm425, %v803, 0
        %822 = vmatprep.subr.bf16.mxu0 0
        %823 = vmatpush1.bf16.msra.mxu0 %v812
        %824 = vmatprep.subr.bf16.mxu0 0
        %825 = vmatpush1.bf16.msra.mxu0 %v813
        %826 = vmatprep.subr.bf16.mxu0 0
        %827 = vmatpush1.bf16.msra.mxu0 0
        %828 = vmatprep.subr.bf16.mxu0 0
        %829 = vmatpush1.bf16.msra.mxu0 0
        %830 = vmatprep.subr.bf16.mxu0 0
        %831 = vmatpush1.bf16.msra.mxu0 0
        %832 = vmatprep.subr.bf16.mxu0 0
        %833 = vmatpush1.bf16.msra.mxu0 0
        %834 = vmatprep.subr.bf16.mxu0 0
        %835 = vmatpush1.bf16.msra.mxu0 0
        %836 = vmatprep.subr.bf16.mxu0 0
        %837 = vmatpush1.bf16.msra.mxu0 0
        %838 = vmatprep.subr.bf16.mxu0 0
        %839 = vmatpush1.bf16.msra.mxu0 0
        %840 = vmatprep.subr.bf16.mxu0 0
        %841 = vmatpush1.bf16.msra.mxu0 0
        %842 = vmatprep.subr.bf16.mxu0 0
        %843 = vmatpush1.bf16.msra.mxu0 0
        %844 = vmatprep.subr.bf16.mxu0 0
        %845 = vmatpush1.bf16.msra.mxu0 0
        %846 = vmatprep.subr.bf16.mxu0 0
        %847 = vmatpush1.bf16.msra.mxu0 0
        %848 = vmatprep.subr.bf16.mxu0 0
        %849 = vmatpush1.bf16.msra.mxu0 0
        %850 = vmatprep.subr.bf16.mxu0 0
        %851 = vmatpush1.bf16.msra.mxu0 0
        %852 = vmatprep.subr.bf16.mxu0 0
        %853 = vmatpush1.bf16.msra.mxu0 0
        %854 = vmatprep.mubr.bf16.mxu0 0
        %855 = vmatmul.mubr.bf16.gmra.mrb[0].mxu0 %v817
        %v856 = vpop.f32.mrb[0].mxu0
        %v857 = vadd.f32 %v780, %v856
        %v858 = vpop.f32.mrb[0].mxu0
        %v859 = vpop.f32.mrb[0].mxu0
        %v860 = vadd.f32 %v783, %v859
        %v861 = vpop.f32.mrb[0].mxu0
        %862 = vmatprep.mubr.bf16.mxu0 0
        %863 = vmatmul.mubr.bf16.gmra.mrb[0].mxu0 %v820
        %v864 = vpop.f32.mrb[0].mxu0
        %v865 = vadd.f32 %v788, %v864
        %v866 = vpop.f32.mrb[0].mxu0
        %v867 = vpop.f32.mrb[0].mxu0
        %v868 = vadd.f32 %v791, %v867
        %v869 = vpop.f32.mrb[0].mxu0
        %870 = vdwg.mxu0
        %v871 = vld [vmem:[#allocation2] sm:$0xf]
        %v872 = vld [vmem:[#allocation2 + $0x4] sm:$0xf]
        %v873 = vld [vmem:[#allocation2 + $0x8] sm:$0xf]
        %v874 = vld [vmem:[#allocation2 + $0xc] sm:$0xf]
        %s875 = scalar_lea.vmem %s345, 16 [#allocation8]
        %v876 = vld [vmem:[%s875] sm:$0xf]
        %v877 = vld [vmem:[%s875 + $0x4] sm:$0xf]
        %v878 = vld [vmem:[%s875 + $0x8] sm:$0xf]
        %v879 = vld [vmem:[%s875 + $0xc] sm:$0xf]
        %v884 = vunpack.c.l.b16 %v871
        %v885 = vunpack.c.l.b16 %v872
        %v886 = vunpack.c.l.b16 %v873
        %v887 = vunpack.c.l.b16 %v874
        %v888 = vpack.c.b16 %v885, %v884
        %v889 = vpack.c.b16 %v887, %v886
        %v894 = vunpack.c.l.b16 %v876
        %v895 = vunpack.c.l.b16 %v877
        %v896 = vunpack.c.l.b16 %v878
        %v897 = vunpack.c.l.b16 %v879
        %v898 = vpack.c.b16 %v895, %v894
        %v899 = vpack.c.b16 %v897, %v896
        %v903 = vsel %vm425, %v888, 0
        %v906 = vsel %vm425, %v889, 0
        %908 = vmatprep.subr.bf16.mxu0 0
        %909 = vmatpush1.bf16.msra.mxu0 %v898
        %910 = vmatprep.subr.bf16.mxu0 0
        %911 = vmatpush1.bf16.msra.mxu0 %v899
        %912 = vmatprep.subr.bf16.mxu0 0
        %913 = vmatpush1.bf16.msra.mxu0 0
        %914 = vmatprep.subr.bf16.mxu0 0
        %915 = vmatpush1.bf16.msra.mxu0 0
        %916 = vmatprep.subr.bf16.mxu0 0
        %917 = vmatpush1.bf16.msra.mxu0 0
        %918 = vmatprep.subr.bf16.mxu0 0
        %919 = vmatpush1.bf16.msra.mxu0 0
        %920 = vmatprep.subr.bf16.mxu0 0
        %921 = vmatpush1.bf16.msra.mxu0 0
        %922 = vmatprep.subr.bf16.mxu0 0
        %923 = vmatpush1.bf16.msra.mxu0 0
        %924 = vmatprep.subr.bf16.mxu0 0
        %925 = vmatpush1.bf16.msra.mxu0 0
        %926 = vmatprep.subr.bf16.mxu0 0
        %927 = vmatpush1.bf16.msra.mxu0 0
        %928 = vmatprep.subr.bf16.mxu0 0
        %929 = vmatpush1.bf16.msra.mxu0 0
        %930 = vmatprep.subr.bf16.mxu0 0
        %931 = vmatpush1.bf16.msra.mxu0 0
        %932 = vmatprep.subr.bf16.mxu0 0
        %933 = vmatpush1.bf16.msra.mxu0 0
        %934 = vmatprep.subr.bf16.mxu0 0
        %935 = vmatpush1.bf16.msra.mxu0 0
        %936 = vmatprep.subr.bf16.mxu0 0
        %937 = vmatpush1.bf16.msra.mxu0 0
        %938 = vmatprep.subr.bf16.mxu0 0
        %939 = vmatpush1.bf16.msra.mxu0 0
        %940 = vmatprep.mubr.bf16.mxu0 0
        %941 = vmatmul.mubr.bf16.gmra.mrb[0].mxu0 %v903
        %v942 = vpop.f32.mrb[0].mxu0
        %v943 = vadd.f32 0.0, %v942
        %v944 = vpop.f32.mrb[0].mxu0
        %v945 = vpop.f32.mrb[0].mxu0
        %v946 = vadd.f32 0.0, %v945
        %v947 = vpop.f32.mrb[0].mxu0
        %948 = vmatprep.mubr.bf16.mxu0 0
        %949 = vmatmul.mubr.bf16.gmra.mrb[0].mxu0 %v906
        %v950 = vpop.f32.mrb[0].mxu0
        %v951 = vadd.f32 0.0, %v950
        %v952 = vpop.f32.mrb[0].mxu0
        %v953 = vpop.f32.mrb[0].mxu0
        %v954 = vadd.f32 0.0, %v953
        %v955 = vpop.f32.mrb[0].mxu0
        %956 = vdwg.mxu0
        %v957 = vadd.f32 %v857, %v943
        %v958 = vadd.f32 %v860, %v946
        %v959 = vadd.f32 %v865, %v951
        %v960 = vadd.f32 %v868, %v954
        %v961 = vld [vmem:[%s3] sm:$0xff]
        %v962 = vld [vmem:[%s3 + $0x8] sm:$0xff]
        %v963 = vld [vmem:[%s3 + $0x10] sm:$0xff]
        %v964 = vld [vmem:[%s3 + $0x18] sm:$0xff]
        %966 = vset.pattern.permute.xlu0 0
        %967 = vperm.xlu0 %966, %v961
        %v968 = vpop.permute.xlu0 %967
        %971 = vset.pattern.permute.xlu0 0
        %972 = vperm.xlu0 %971, %v962
        %v973 = vpop.permute.xlu0 %972
        %976 = vset.pattern.permute.xlu0 0
        %977 = vperm.xlu0 %976, %v963
        %v978 = vpop.permute.xlu0 %977
        %981 = vset.pattern.permute.xlu0 0
        %982 = vperm.xlu0 %981, %v964
        %v983 = vpop.permute.xlu0 %982
        %v985 = vadd.f32 %v957, %v968
        %v986 = vadd.f32 %v958, %v973
        %v987 = vadd.f32 %v959, %v978
        %v988 = vadd.f32 %v960, %v983
        %v989 = vmax.f32 %v985, 0.0
        %v990 = vmax.f32 %v986, 0.0
        %v991 = vmax.f32 %v987, 0.0
        %v992 = vmax.f32 %v988, 0.0
        %v993 = vpack.c.bf16 %v990, %v989
        %v994 = vpack.c.bf16 %v992, %v991
        %v997 = vunpack.c.l.b16 %v993
        %v998 = vunpack.c.h.b16 %v993
        %v999 = vunpack.c.l.b16 %v994
        %v1000 = vunpack.c.h.b16 %v994
        %v1001 = vpack.c.b16 %v997, %v997
        %v1002 = vpack.c.b16 %v998, %v998
        %v1003 = vpack.c.b16 %v999, %v999
        %v1004 = vpack.c.b16 %v1000, %v1000
        %s1009 = scalar_lea.vmem %s385, 16 [#allocation10]
        %1010 = vst [vmem:[%s1009] sm:$0xf] %v1001
        %1011 = vst [vmem:[%s1009 + $0x4] sm:$0xf] %v1002
        %1012 = vst [vmem:[%s1009 + $0x8] sm:$0xf] %v1003
        %1013 = vst [vmem:[%s1009 + $0xc] sm:$0xf] %v1004
        %s1014 = sand.u32 %s198, 1
        %s1015 = scalar_lea.sflag [#allocation4], %s1014
        %s1016 = sand.u32 %s198, 1
        %s1017 = smul.addr %s1016, 32
        %s1018 = scalar_lea.vmem [#allocation10], %s1017
        // Predicated region
        $region65: #{tpu_custom_call.1} parent=47 // pred_check
          %p1019 = pneg %p208
        $region66: #{tpu_custom_call.1} parent=47 // pred_check_branch
          %1021 = sbr.rel (%p1019) target = $region68
        $region67: #{tpu_custom_call.1} parent=47 // pred_region
          %s1023 = ssub.s32 512, 512
          %1024 = vsyncadd %s1015, %s1023
          %s1025 = smul.addr %s28, 64
          %s1026 = scalar_lea.hbm %s7, %s1025
          %s1027 = sshll.u32 %s1018, 4
          %s1028 = int_to_ptr.vmem [resolvable:$true] %s1027
          %1033 = dma.vmem_to_hbm [thread:$0]  %s1028, 512, %s1026, %s1015, 64, 128, 4
        $region68: #{tpu_custom_call.1} parent=47 // pred_fallthru
          _
      $region48: #{tpu_custom_call.1} parent=5 // pred_fallthru
        _
      %p1034 = scmp.le.s32.totalorder 2, %s23
      // Predicated region
      $region69: #{tpu_custom_call.1} parent=5 // pred_check
        %p1035 = pneg %p1034
      $region70: #{tpu_custom_call.1} parent=5 // pred_check_branch
        %1037 = sbr.rel (%p1035) target = $region72
      $region71: #{tpu_custom_call.1} parent=5 // pred_region
        %s1038 = ssub.s32 %s23, 2
        // Predicated region
        $region73: #{tpu_custom_call.1} parent=71 // pred_check
          %p1039 = pneg %p214
        $region74: #{tpu_custom_call.1} parent=71 // pred_check_branch
          %1041 = sbr.rel (%p1039) target = $region76
        $region75: #{tpu_custom_call.1} parent=71 // pred_region
          %s1042 = sand.u32 %s199, 1
          %s1043 = scalar_lea.sflag [#allocation4], %s1042
          %s1044 = sand.u32 %s199, 1
          %s1045 = smul.addr %s1044, 32
          %s1046 = scalar_lea.vmem [#allocation10], %s1045
          %1047 = dma.done %s1043, 512
        $region76: #{tpu_custom_call.1} parent=71 // pred_fallthru
          _
      $region72: #{tpu_custom_call.1} parent=5 // pred_fallthru
        _
    $region6: #{tpu_custom_call.1} parent=1 // loop_footer
      %s27 = sadd.s32 1, %s23
    $region7: #{tpu_custom_call.1} parent=1 // loop_footer_branch
      %22 = sbr.rel target = $region3
    $region8: #{tpu_custom_call.1} parent=1 // loop_exit
      _
    %1048 = vsyncpa [#allocation3], 1
    %s1049 = scalar_lea.sflag [#allocation3], 1
    %1050 = vsyncpa %s1049, 1
    %1051 = vsyncpa [#allocation6], 1
    %s1052 = scalar_lea.sflag [#allocation6], 1
    %1053 = vsyncpa %s1052, 1
    %1054 = vsyncpa [#allocation9], 1
    %s1055 = scalar_lea.sflag [#allocation9], 1
    %1056 = vsyncpa %s1055, 1
    %1057 = vsyncpa [#allocation4], 1
    %s1058 = scalar_lea.sflag [#allocation4], 1
    %1059 = vsyncpa %s1058, 1

</llo_original>
